<compile_context>
chip_gen: v7x
topology: tpu7x:2x2x1
jax: 0.10.0
libtpu: 0.0.40
codegen_flags: <defaults>
</compile_context>

<pallas_src>
import functools

import jax
import jax.numpy as jnp
from jax import lax
from jax.experimental import pallas as pl
from jax.experimental.pallas import tpu as pltpu

LN_EPS = 1e-5                      # nn.LayerNorm default eps
_LANE = 512                        # lane-dense last dim for the elementwise kernel
_MAX_TILE_ROWS = 1024              # cap on rows per block
_VMEM_BUDGET = 16 * 1024 * 1024    # target bytes of double-buffered blocks per kernel
_VMEM_LIMIT = 32 * 1024 * 1024     # scoped-VMEM request (safe on v5e / v6e / v7x)


# ------------------------------------------------------------------ helpers --

def _round_up(x: int, m: int) -> int:
    return ((x + m - 1) // m) * m


def _pick_row_tile(lane_width: int, n_arrays: int, dtype_bytes: int, rows: int) -> int:
    """Largest multiple-of-8 row tile whose double-buffered blocks fit the budget."""
    per_row = n_arrays * 2 * lane_width * dtype_bytes   # 2 = double buffering
    tr = (_VMEM_BUDGET // per_row) // 8 * 8
    tr = max(8, min(tr, _MAX_TILE_ROWS))
    return min(tr, _round_up(rows, 8))


def _to_lanes(a2, total_p: int):
    """Flatten and pad to total_p elements, view as a lane-dense (rows, _LANE) slab."""
    flat = a2.reshape(-1)
    t = flat.shape[0]
    if total_p != t:
        flat = jnp.pad(flat, (0, total_p - t))
    return flat.reshape(total_p // _LANE, _LANE)


# ------------------------------------------------------------------ kernels --

def _layernorm_kernel(x_ref, w_ref, b_ref, o_ref):
    """LayerNorm over the last dim of a (tr, d) tile; stats in f32."""
    x = x_ref[...].astype(jnp.float32)
    w = w_ref[...].astype(jnp.float32)            # (1, d)
    b = b_ref[...].astype(jnp.float32)            # (1, d)
    mean = jnp.mean(x, axis=-1, keepdims=True)
    xc = x - mean
    var = jnp.mean(xc * xc, axis=-1, keepdims=True)
    inv = lax.rsqrt(var + LN_EPS)                 # (tr, 1), EUP path
    o_ref[...] = (xc * (inv * w) + b).astype(o_ref.dtype)


def _add_kernel(x_ref, y_ref, o_ref):
    """Residual add (dropout disabled / p == 0); native dtype math."""
    o_ref[...] = x_ref[...] + y_ref[...]


def _dropout_add_kernel(x_ref, y_ref, bits_ref, o_ref, *, threshold, scale):
    """out = x + inverted-dropout(y); keep mask = integer compare on raw bits."""
    keep = bits_ref[...] >= jnp.uint32(threshold)
    y = y_ref[...]
    scaled = y * jnp.asarray(scale, dtype=y.dtype)
    o_ref[...] = x_ref[...] + jnp.where(keep, scaled, jnp.zeros_like(scaled))


# ----------------------------------------------------------------- wrappers --

def _layernorm(x2, weight, bias):
    R, d = x2.shape
    tr = _pick_row_tile(d, n_arrays=2, dtype_bytes=max(x2.dtype.itemsize, 4), rows=R)
    Rp = _round_up(R, tr)
    xp = x2 if Rp == R else jnp.pad(x2, ((0, Rp - R), (0, 0)))
    out = pl.pallas_call(
        _layernorm_kernel,
        out_shape=jax.ShapeDtypeStruct((Rp, d), x2.dtype),
        grid=(Rp // tr,),
        in_specs=[
            pl.BlockSpec((tr, d), lambda i: (i, 0)),
            pl.BlockSpec((1, d), lambda i: (0, 0)),
            pl.BlockSpec((1, d), lambda i: (0, 0)),
        ],
        out_specs=pl.BlockSpec((tr, d), lambda i: (i, 0)),
        compiler_params=pltpu.CompilerParams(
            dimension_semantics=("parallel",),
            vmem_limit_bytes=_VMEM_LIMIT),
    )(xp, weight.reshape(1, d), bias.reshape(1, d))
    return out[:R] if Rp != R else out


def _dropout_add(x2, y2, *, dropout_p, key, training):
    R, d = x2.shape
    y2 = y2.astype(x2.dtype)
    T = R * d
    use_dropout = training and dropout_p > 0.0
    if use_dropout and dropout_p >= 1.0:
        return x2                                  # everything dropped

    n_arrays = 4 if use_dropout else 3             # x, y, (bits,) out blocks
    rows = pl.cdiv(T, _LANE)
    tr = _pick_row_tile(_LANE, n_arrays=n_arrays, dtype_bytes=4, rows=rows)
    rows_p = _round_up(rows, tr)
    total_p = rows_p * _LANE
    xf = _to_lanes(x2, total_p)
    yf = _to_lanes(y2, total_p)

    grid = (rows_p // tr,)
    blk = pl.BlockSpec((tr, _LANE), lambda i: (i, 0))
    cp = pltpu.CompilerParams(dimension_semantics=("parallel",),
                              vmem_limit_bytes=_VMEM_LIMIT)

    if not use_dropout:
        of = pl.pallas_call(
            _add_kernel,
            out_shape=jax.ShapeDtypeStruct((rows_p, _LANE), x2.dtype),
            grid=grid,
            in_specs=[blk, blk],
            out_specs=blk,
            compiler_params=cp,
        )(xf, yf)
    else:
        p = float(dropout_p)
        threshold = min(int(round(p * 2.0 ** 32)), 2 ** 32 - 1)   # P(keep) = 1 - p
        kernel = functools.partial(_dropout_add_kernel,
                                   threshold=threshold, scale=1.0 / (1.0 - p))
        bits = jax.random.bits(key, (rows_p, _LANE), dtype=jnp.uint32)
        of = pl.pallas_call(
            kernel,
            out_shape=jax.ShapeDtypeStruct((rows_p, _LANE), x2.dtype),
            grid=grid,
            in_specs=[blk, blk, blk],
            out_specs=blk,
            compiler_params=cp,
        )(xf, yf, bits)

    return of.reshape(-1)[:T].reshape(R, d)


def norm_add(hidden_state_ncd, sublayer, ln_weight, ln_bias, *,
             dropout_p=0.0, dropout_key=None, training=True):
    """out = x + dropout(sublayer(LayerNorm(x))), x of shape (n, c, d)."""
    n, c, d = hidden_state_ncd.shape
    x2 = hidden_state_ncd.reshape(n * c, d)

    ln_out = _layernorm(x2, ln_weight, ln_bias)                  # Pallas kernel 1
    y = sublayer(ln_out.reshape(n, c, d)).reshape(n * c, d)      # black-box callable (plain JAX)
    if dropout_key is None:
        dropout_key = jax.random.PRNGKey(0)
    out = _dropout_add(x2, y, dropout_p=dropout_p,
                       key=dropout_key, training=training)       # Pallas kernel 2
    return out.reshape(n, c, d)


# --------------------------------------------------------------------- main --

if __name__ == "__main__":
    key = jax.random.PRNGKey(0)
    n, c, d = 2, 4, 32          # (batch, tokens, hidden); norm_shape = d
    dropout_p = 0.1
    use_bias = True

    kx, kw, kd = jax.random.split(key, 3)
    x_ncd = jax.random.normal(kx, (n, c, d), dtype=jnp.float32)

    # LayerNorm params as produced by reset_parameters(): weight=1, bias=0.
    ln_weight = jnp.ones((d,), dtype=jnp.float32)
    ln_bias = jnp.zeros((d,), dtype=jnp.float32) if use_bias else jnp.zeros((d,), jnp.float32)

    # Deterministic example sublayer: a simple linear projection d -> d.
    w_sub = jax.random.normal(kw, (d, d), dtype=jnp.float32) * (1.0 / jnp.sqrt(d))
    sublayer = lambda h: jnp.einsum("ncd,de->nce", h, w_sub)

    # --- pure-JAX reference pieces ---
    def ref_ln(x):
        mu = jnp.mean(x, axis=-1, keepdims=True)
        var = jnp.mean((x - mu) ** 2, axis=-1, keepdims=True)
        return (x - mu) * lax.rsqrt(var + LN_EPS) * ln_weight + ln_bias

    def ref_norm_add_eval(x):
        return x + sublayer(ref_ln(x))

    # --- correctness check with dropout disabled (eval mode) ---
    out_eval = norm_add(x_ncd, sublayer, ln_weight, ln_bias,
                        dropout_p=dropout_p, training=False)
    out_eval = jax.block_until_ready(out_eval)
    ref = ref_norm_add_eval(x_ncd)
    assert out_eval.shape == (n, c, d)
    assert jnp.allclose(out_eval, ref, atol=1e-5, rtol=1e-5), "mismatch vs reference"

    # --- training-mode run with in-kernel dropout select ---
    out_train = norm_add(x_ncd, sublayer, ln_weight, ln_bias,
                         dropout_p=dropout_p, dropout_key=kd, training=True)
    out_train = jax.block_until_ready(out_train)
    assert out_train.shape == (n, c, d)
    assert jnp.all(jnp.isfinite(out_train))

    # Structural check: every residual element is either ~0 (dropped) or
    # ~sublayer(LN(x)) / (1 - p) (kept, inverted-dropout scaled).
    y_ref = sublayer(ref_ln(x_ncd))
    resid = out_train - x_ncd
    dist = jnp.minimum(jnp.abs(resid),
                       jnp.abs(resid - y_ref / (1.0 - dropout_p)))
    assert jnp.max(dist) < 1e-3, "dropout residual structure mismatch"

    print("KERNEL_OK")
</pallas_src>

<mosaic_0001>
module attributes {stable_mosaic.version = 11 : i64} {
  func.func @_layernorm_kernel(%arg0: i32, %arg1: memref<8x32xf32, #tpu.memory_space<vmem>>, %arg2: memref<1x32xf32, #tpu.memory_space<vmem>>, %arg3: memref<1x32xf32, #tpu.memory_space<vmem>>, %arg4: memref<8x32xf32, #tpu.memory_space<vmem>>) attributes {dimension_semantics = [#tpu.dimension_semantics<parallel>], iteration_bounds = array<i64: 1>, scalar_prefetch = 0 : i64, scratch_operands = 0 : i64, tpu.core_type = #tpu.core_type<tc>, window_params = [{transform_indices = @transform_0, window_bounds = array<i64: 8, 32>}, {pipeline_mode = #tpu.pipeline_mode<synchronous>, transform_indices = @transform_1, window_bounds = array<i64: 1, 32>}, {pipeline_mode = #tpu.pipeline_mode<synchronous>, transform_indices = @transform_2, window_bounds = array<i64: 1, 32>}, {transform_indices = @transform_3, window_bounds = array<i64: 8, 32>}]} {
    %c0 = arith.constant 0 : index
    %c0_0 = arith.constant 0 : index
    %0 = vector.load %arg1[%c0, %c0_0] : memref<8x32xf32, #tpu.memory_space<vmem>>, vector<8x32xf32>
    %c0_1 = arith.constant 0 : index
    %c0_2 = arith.constant 0 : index
    %1 = vector.load %arg2[%c0_1, %c0_2] : memref<1x32xf32, #tpu.memory_space<vmem>>, vector<1x32xf32>
    %c0_3 = arith.constant 0 : index
    %c0_4 = arith.constant 0 : index
    %2 = vector.load %arg3[%c0_3, %c0_4] : memref<1x32xf32, #tpu.memory_space<vmem>>, vector<1x32xf32>
    %cst = arith.constant dense<0.000000e+00> : vector<8xf32>
    %3 = vector.multi_reduction <add>, %0, %cst [1] : vector<8x32xf32> to vector<8xf32>
    %4 = vector.shape_cast %3 : vector<8xf32> to vector<8x1xf32>
    %cst_5 = arith.constant 3.200000e+01 : f32
    %5 = vector.broadcast %cst_5 : f32 to vector<8x1xf32>
    %6 = arith.divf %4, %5 : vector<8x1xf32>
    %7 = vector.broadcast %6 : vector<8x1xf32> to vector<8x32xf32>
    %8 = arith.subf %0, %7 : vector<8x32xf32>
    %9 = arith.mulf %8, %8 : vector<8x32xf32>
    %cst_6 = arith.constant dense<0.000000e+00> : vector<8xf32>
    %10 = vector.multi_reduction <add>, %9, %cst_6 [1] : vector<8x32xf32> to vector<8xf32>
    %11 = vector.shape_cast %10 : vector<8xf32> to vector<8x1xf32>
    %cst_7 = arith.constant 3.200000e+01 : f32
    %12 = vector.broadcast %cst_7 : f32 to vector<8x1xf32>
    %13 = arith.divf %11, %12 : vector<8x1xf32>
    %cst_8 = arith.constant 9.99999974E-6 : f32
    %14 = vector.broadcast %cst_8 : f32 to vector<8x1xf32>
    %15 = arith.addf %13, %14 : vector<8x1xf32>
    %16 = math.rsqrt %15 : vector<8x1xf32>
    %17 = vector.broadcast %16 : vector<8x1xf32> to vector<8x32xf32>
    %18 = vector.broadcast %1 : vector<1x32xf32> to vector<8x32xf32>
    %19 = arith.mulf %17, %18 : vector<8x32xf32>
    %20 = arith.mulf %8, %19 : vector<8x32xf32>
    %21 = vector.broadcast %2 : vector<1x32xf32> to vector<8x32xf32>
    %22 = arith.addf %20, %21 : vector<8x32xf32>
    %c0_9 = arith.constant 0 : index
    %c0_10 = arith.constant 0 : index
    %23 = vector.load %arg4[%c0_9, %c0_10] : memref<8x32xf32, #tpu.memory_space<vmem>>, vector<8x32xf32>
    tpu.vector_store %arg4[%c0_9, %c0_10], %22 {strides = array<i32>} : memref<8x32xf32, #tpu.memory_space<vmem>>, vector<8x32xf32>,
    return
  }
  func.func @transform_0(%arg0: i32) -> (i32, i32) {
    %c0_i32 = arith.constant 0 : i32
    %c0_i32_0 = arith.constant 0 : i32
    return %arg0, %c0_i32 : i32, i32
  }
  func.func @transform_1(%arg0: i32) -> (i32, i32) {
    %c0_i32 = arith.constant 0 : i32
    %c0_i32_0 = arith.constant 0 : i32
    %c0_i32_1 = arith.constant 0 : i32
    return %c0_i32, %c0_i32_0 : i32, i32
  }
  func.func @transform_2(%arg0: i32) -> (i32, i32) {
    %c0_i32 = arith.constant 0 : i32
    %c0_i32_0 = arith.constant 0 : i32
    %c0_i32_1 = arith.constant 0 : i32
    return %c0_i32, %c0_i32_0 : i32, i32
  }
  func.func @transform_3(%arg0: i32) -> (i32, i32) {
    %c0_i32 = arith.constant 0 : i32
    %c0_i32_0 = arith.constant 0 : i32
    return %arg0, %c0_i32 : i32, i32
  }
}

</mosaic_0001>

<llo_original>
// kernel: tpu_custom_call.1
$region0: #{tpu_custom_call.1}
  #allocation0 [shape = 'u32[]', space=smem, size = 0x4, offset = 0x4, fixed_abs, tag = 'smem constant byte address 0x4 - core index']
  #allocation1 [shape = 'u32[144,128]{1,0:T(1,128)}', space=vmem, size = 0x12000, scoped, tag = 'internal scratch']
  %s0 = inlined_call_operand.hbm [shape: f32[8,32], index: 0, kind: input, shape index: {}]
  %s1 = inlined_call_operand.vmem [shape: f32[1,32], index: 1, kind: input, shape index: {}]
  %s2 = inlined_call_operand.vmem [shape: f32[1,32], index: 2, kind: input, shape index: {}]
  %s3 = inlined_call_operand.hbm [shape: f32[8,32], index: 3, kind: output, shape index: {}]
  %s4 = sld [smem:[#allocation0]]
  $region26: #{tpu_custom_call.1} parent=0
    _
  %s6 = ssub.s32 1, %s4
  %s7 = scalar_select 0, %s6, %s4
  $region1: #{tpu_custom_call.1} parent=0
    #allocation2 [shape = 'u8[4096]{0}', space=vmem, size = 0x1000, scoped, tag = 'input window, operand 0, single buffered']
    #allocation3 [shape = 's32[1]{0}', space=sflag, size = 0x4, scoped, tag = 'scoped memory for tpu_custom_call.1']
    #allocation4 [shape = 's32[1]{0}', space=sflag, size = 0x4, scoped, tag = 'scoped memory for tpu_custom_call.1']
    #allocation5 [shape = 'u8[4096]{0}', space=vmem, size = 0x1000, scoped, tag = 'output window, operand 0, single buffered']
    %8 = vsyncpa [#allocation3], 0
    %9 = vsyncpa [#allocation4], 0
    // Predicated region
    $region2: #{tpu_custom_call.1} parent=1 // pred_check
      _
    $region3: #{tpu_custom_call.1} parent=1 // pred_check_branch
      %11 = sbr.rel (0) target = $region5
    $region4: #{tpu_custom_call.1} parent=1 // pred_region
      %s13 = ssub.s32 128, 128
      %14 = vsyncadd [#allocation3], %s13
      %s16 = sshll.u32 [#allocation2], 4
      %s17 = int_to_ptr.vmem [resolvable:$true] %s16
      %19 = dma.hbm_to_vmem [thread:$0]  %s0, 128, %s17, [#allocation3]
    $region5: #{tpu_custom_call.1} parent=1 // pred_fallthru
      _
    // Predicated region
    $region6: #{tpu_custom_call.1} parent=1 // pred_check
      _
    $region7: #{tpu_custom_call.1} parent=1 // pred_check_branch
      %21 = sbr.rel (0) target = $region9
    $region8: #{tpu_custom_call.1} parent=1 // pred_region
      _
    $region9: #{tpu_custom_call.1} parent=1 // pred_fallthru
      _
    // Predicated region
    $region10: #{tpu_custom_call.1} parent=1 // pred_check
      _
    $region11: #{tpu_custom_call.1} parent=1 // pred_check_branch
      %23 = sbr.rel (0) target = $region13
    $region12: #{tpu_custom_call.1} parent=1 // pred_region
      _
    $region13: #{tpu_custom_call.1} parent=1 // pred_fallthru
      _
    // Predicated region
    $region14: #{tpu_custom_call.1} parent=1 // pred_check
      _
    $region15: #{tpu_custom_call.1} parent=1 // pred_check_branch
      %25 = sbr.rel (0) target = $region17
    $region16: #{tpu_custom_call.1} parent=1 // pred_region
      %26 = dma.done [#allocation3], 128
    $region17: #{tpu_custom_call.1} parent=1 // pred_fallthru
      _
    %v27 = vld [vmem:[#allocation2] sm:$0xff]
    %v28 = vld [vmem:[%s1] sm:$0x1]
    %v29 = vld [vmem:[%s2] sm:$0x1]
    %vm30 = vcmask 261120
    %v31 = vsel %vm30, %v27, 0.0
    %32 = vadd.xlane.f32.xlu0 %v31
    %v33 = vpop.xlane.xlu0 %32
    %v34 = vrcp.pop 32.0
    %v35 = vmul.f32 %v33, %v34
    %v36 = vsub.f32 %v27, %v35
    %v37 = vmul.f32 %v36, %v36
    %v38 = vsel %vm30, %v37, 0.0
    %39 = vadd.xlane.f32.xlu0 %v38
    %v40 = vpop.xlane.xlu0 %39
    %v41 = vmul.f32 %v40, %v34
    %v42 = vadd.f32 %v41, 1e-05
    %v43 = vrsqrt.pop %v42
    %v45 = vlaneseq
    %v46 = vshrl.u32 %v45, 7
    %v47 = vsub.s32 0, %v46
    %v48 = vrot.slane %v28, %v47
    %v50 = vmul.f32 %v43, %v48
    %v51 = vmul.f32 %v36, %v50
    %v53 = vlaneseq
    %v54 = vshrl.u32 %v53, 7
    %v55 = vsub.s32 0, %v54
    %v56 = vrot.slane %v29, %v55
    %v58 = vadd.f32 %v51, %v56
    %59 = vst.msk [vmem:[#allocation5] sm:$0xff] %vm30, %v58
    // Predicated region
    $region18: #{tpu_custom_call.1} parent=1 // pred_check
      _
    $region19: #{tpu_custom_call.1} parent=1 // pred_check_branch
      %61 = sbr.rel (0) target = $region21
    $region20: #{tpu_custom_call.1} parent=1 // pred_region
      %s63 = ssub.s32 128, 128
      %64 = vsyncadd [#allocation4], %s63
      %s66 = sshll.u32 [#allocation5], 4
      %s67 = int_to_ptr.vmem [resolvable:$true] %s66
      %69 = dma.vmem_to_hbm [thread:$0]  %s67, 128, %s3, [#allocation4]
    $region21: #{tpu_custom_call.1} parent=1 // pred_fallthru
      _
    // Predicated region
    $region22: #{tpu_custom_call.1} parent=1 // pred_check
      _
    $region23: #{tpu_custom_call.1} parent=1 // pred_check_branch
      %71 = sbr.rel (0) target = $region25
    $region24: #{tpu_custom_call.1} parent=1 // pred_region
      %72 = dma.done [#allocation4], 128
    $region25: #{tpu_custom_call.1} parent=1 // pred_fallthru
      _
    %73 = vsyncpa [#allocation3], 1
    %74 = vsyncpa [#allocation4], 1

</llo_original>
